<compile_context>
chip_gen: v6e
topology: v6e:2x2x1
jax: 0.10.0
libtpu: 0.0.40
codegen_flags: <defaults>
</compile_context>

<pallas_src>
import functools

import numpy as np
import jax
import jax.numpy as jnp
from jax import lax
from jax.experimental import pallas as pl
from jax.experimental.pallas import tpu as pltpu


def _ipow(x, p):
    if p == 1:
        return x
    if p == 2:
        return x * x
    return lax.integer_pow(x, p)


def _dice_kernel(pred_ref, mask_ref, out_ref, *scratch,
                 p, alpha, eps, tail_valid, needs_mask, track_msum):
    """Grid: (batch, feature-chunk). Accumulators persist along the chunk axis."""
    if track_msum:
        inter_acc, denom_acc, msum_acc = scratch
    else:
        inter_acc, denom_acc = scratch
        msum_acc = None

    j = pl.program_id(1)
    last = pl.num_programs(1) - 1

    @pl.when(j == 0)
    def _():
        inter_acc[...] = jnp.zeros_like(inter_acc)
        denom_acc[...] = jnp.zeros_like(denom_acc)
        if track_msum:
            msum_acc[...] = jnp.zeros_like(msum_acc)

    pred = pred_ref[...].astype(jnp.float32)   # (S, block_dc)
    mask = mask_ref[...].astype(jnp.float32)   # (S, block_dc)

    def _accumulate(pr, mk):
        # Pure elementwise (VALU) accumulation; no per-step cross-lane reductions.
        inter_acc[...] += pr * mk
        denom_acc[...] += _ipow(pr, p) + _ipow(mk, p)
        if track_msum:
            msum_acc[...] += mk

    if needs_mask:
        # Only the tail chunk carries out-of-range lanes (unspecified data);
        # every other chunk stays on the cheap unmasked path.
        @pl.when(j != last)
        def _():
            _accumulate(pred, mask)

        @pl.when(j == last)
        def _():
            lane = lax.broadcasted_iota(jnp.int32, pred.shape, 1)
            valid = lane < tail_valid
            _accumulate(jnp.where(valid, pred, 0.0),
                        jnp.where(valid, mask, 0.0))
    else:
        _accumulate(pred, mask)

    @pl.when(j == last)
    def _():
        inter = jnp.sum(inter_acc[...])
        union = jnp.sum(denom_acc[...])
        dl = 1.0 - (2.0 * inter + eps) / (union + eps)
        if track_msum:
            dl = jnp.where(jnp.sum(msum_acc[...]) > 0, dl, alpha * dl)
        # Lane-dense full-tile store of this sample's scalar loss.
        out_ref[...] = jnp.broadcast_to(dl, out_ref.shape)


def binary_dice_loss(pred, mask, *, reduction='mean', p=2, alpha=1.0, eps=1.0,
                     block_lanes=32768):
    """Pallas implementation of BinaryDiceLoss.forward."""
    assert pred.shape == mask.shape, (
        f'Prediction and Mask should have the same dimensions! '
        f'Given: Prediction {pred.shape} / Mask {mask.shape}')
    assert reduction in ('mean', 'sum', 'none')
    p = int(p)
    assert p >= 1, 'p must be a positive integer'

    B = pred.shape[0]
    D = int(np.prod(pred.shape[1:])) if pred.ndim > 1 else 1

    # Stream inputs in their native floating dtype (no extra HBM copy);
    # bool / integer masks are cast once here.
    def _as_float(x):
        return x if jnp.issubdtype(x.dtype, jnp.floating) else x.astype(jnp.float32)

    pred = _as_float(pred)
    mask = _as_float(mask)

    # Largest sublane packing dividing D so (8,128) tiles stay dense.
    S = next(s for s in (8, 4, 2, 1) if D % s == 0)
    Dc = D // S
    pred3 = pred.reshape(B, S, Dc)
    mask3 = mask.reshape(B, S, Dc)

    # Lane tiling: whole row if it fits, else a large multiple of 128 with
    # in-kernel masking of the partial tail block (no HBM padding copies).
    block_lanes = max(128, int(block_lanes))
    if Dc <= block_lanes:
        block_dc = Dc
        n_chunks = 1
    else:
        block_dc = (block_lanes // 128) * 128
        n_chunks = int(pl.cdiv(Dc, block_dc))
    tail_valid = Dc - (n_chunks - 1) * block_dc
    needs_mask = (tail_valid != block_dc)

    # alpha == 1.0 (module default) makes the mask-sum branch a no-op; skip it.
    track_msum = (float(alpha) != 1.0)

    kernel = functools.partial(
        _dice_kernel, p=p, alpha=float(alpha), eps=float(eps),
        tail_valid=tail_valid, needs_mask=needs_mask, track_msum=track_msum)

    itemsize = max(pred3.dtype.itemsize, mask3.dtype.itemsize)
    n_acc = 3 if track_msum else 2
    # double-buffered inputs + f32 accumulators (+ slack)
    vmem_need = (2 * 2 * S * block_dc * itemsize
                 + n_acc * S * block_dc * 4 + (1 << 16))
    vmem_limit = int(min(max(2 * vmem_need, 32 * 1024 * 1024), 48 * 1024 * 1024))

    cost = pl.CostEstimate(
        flops=int(B * D * (2 * p + 4)),
        transcendentals=0,
        bytes_accessed=int(B * D * (pred3.dtype.itemsize + mask3.dtype.itemsize)
                           + B * 128 * 4),
    )

    scratch = [pltpu.VMEM((S, block_dc), jnp.float32),   # sum(pred * mask)
               pltpu.VMEM((S, block_dc), jnp.float32)]   # sum(pred^p + mask^p)
    if track_msum:
        scratch.append(pltpu.VMEM((S, block_dc), jnp.float32))   # sum(mask)

    out = pl.pallas_call(
        kernel,
        out_shape=jax.ShapeDtypeStruct((B, 1, 128), jnp.float32),
        grid_spec=pltpu.PrefetchScalarGridSpec(
            num_scalar_prefetch=0,
            grid=(B, n_chunks),
            in_specs=[
                pl.BlockSpec((None, S, block_dc), lambda b, j: (b, 0, j)),
                pl.BlockSpec((None, S, block_dc), lambda b, j: (b, 0, j)),
            ],
            out_specs=pl.BlockSpec((None, 1, 128), lambda b, j: (b, 0, 0)),
            scratch_shapes=scratch,
        ),
        compiler_params=pltpu.CompilerParams(
            # Batch axis is parallel (per-sample output blocks); chunk axis is a
            # reduction over resident accumulators -> arbitrary.
            # TODO(synk): for B == 1 with huge D, additionally split the chunk
            # axis into a parallel outer axis with per-core partial sums.
            dimension_semantics=("parallel", "arbitrary"),
            vmem_limit_bytes=vmem_limit,
        ),
        cost_estimate=cost,
    )(pred3, mask3)

    dl = out[:, 0, 0]
    if reduction == 'mean':
        return dl.mean()
    elif reduction == 'sum':
        return dl.sum()
    return dl


def _reference(pred, mask, *, reduction='mean', p=2, alpha=1.0, eps=1.0):
    """Pure-JAX reference mirroring the PyTorch module (f32 accumulation)."""
    pred = pred.astype(jnp.float32)
    mask = mask.astype(jnp.float32)
    sum_dim = tuple(range(1, pred.ndim))
    inter = jnp.sum(pred * mask, axis=sum_dim)
    union = jnp.sum(pred ** p, axis=sum_dim) + jnp.sum(mask ** p, axis=sum_dim)
    dl = 1.0 - (2.0 * inter + eps) / (union + eps)
    dl = jnp.where(jnp.sum(mask, axis=sum_dim) > 0, dl, alpha * dl)
    if reduction == 'mean':
        return dl.mean()
    elif reduction == 'sum':
        return dl.sum()
    return dl


if __name__ == "__main__":
    key = jax.random.PRNGKey(0)
    k1, k2 = jax.random.split(key)

    # Module defaults: reduction='mean', p=2, alpha=1.0, eps=1
    B, C, H, W = 2, 4, 16, 16
    pred = jax.nn.sigmoid(jax.random.normal(k1, (B, C, H, W), jnp.float32))
    mask = (jax.random.uniform(k2, (B, C, H, W)) > 0.7).astype(jnp.float32)
    mask = mask.at[1].set(0.0)   # sample 1: empty mask -> exercises alpha branch

    for red in ('mean', 'sum', 'none'):
        out = jax.block_until_ready(binary_dice_loss(pred, mask, reduction=red))
        ref = _reference(pred, mask, reduction=red)
        assert jnp.allclose(out, ref, rtol=1e-5, atol=1e-5), (red, out, ref)

    # alpha != 1 makes the empty-mask re-weighting (and msum accumulator) live.
    out_a = jax.block_until_ready(
        binary_dice_loss(pred, mask, reduction='none', alpha=0.5))
    ref_a = _reference(pred, mask, reduction='none', alpha=0.5)
    assert jnp.allclose(out_a, ref_a, rtol=1e-5, atol=1e-5), (out_a, ref_a)

    # Native bf16 inputs: no wrapper-side f32 copy, kernel casts in VMEM.
    out_bf = jax.block_until_ready(
        binary_dice_loss(pred.astype(jnp.bfloat16), mask.astype(jnp.bfloat16)))
    ref_bf = _reference(pred.astype(jnp.bfloat16), mask.astype(jnp.bfloat16))
    assert jnp.allclose(out_bf, ref_bf, rtol=1e-3, atol=1e-3), (out_bf, ref_bf)

    # Feature dim not divisible by 8 (S=4 packing), single chunk.
    k3, k4 = jax.random.split(k2)
    pred_t = jax.nn.sigmoid(jax.random.normal(k3, (2, 3, 10, 10), jnp.float32))
    mask_t = (jax.random.uniform(k4, (2, 3, 10, 10)) > 0.5).astype(jnp.float32)
    out_t = jax.block_until_ready(
        binary_dice_loss(pred_t, mask_t, reduction='none', block_lanes=128))
    ref_t = _reference(pred_t, mask_t, reduction='none')
    assert jnp.allclose(out_t, ref_t, rtol=1e-5, atol=1e-5), (out_t, ref_t)

    # Forced multi-chunk grid with a masked partial tail block:
    # D=2400 -> S=8, Dc=300, block_dc=128 -> 3 chunks, tail_valid=44.
    k5, k6 = jax.random.split(k4)
    pred_m = jax.nn.sigmoid(jax.random.normal(k5, (2, 6, 20, 20), jnp.float32))
    mask_m = (jax.random.uniform(k6, (2, 6, 20, 20)) > 0.5).astype(jnp.float32)
    out_m = jax.block_until_ready(
        binary_dice_loss(pred_m, mask_m, reduction='none', block_lanes=128))
    ref_m = _reference(pred_m, mask_m, reduction='none')
    assert jnp.allclose(out_m, ref_m, rtol=1e-5, atol=1e-5), (out_m, ref_m)

    print("KERNEL_OK")
</pallas_src>

<mosaic_0001>
module attributes {stable_mosaic.version = 11 : i64} {
  func.func @_dice_kernel(%arg0: i32, %arg1: i32, %arg2: memref<1x8x128xf32, #tpu.memory_space<vmem>>, %arg3: memref<1x8x128xf32, #tpu.memory_space<vmem>>, %arg4: memref<1x1x128xf32, #tpu.memory_space<vmem>>, %arg5: memref<8x128xf32, #tpu.memory_space<vmem>>, %arg6: memref<8x128xf32, #tpu.memory_space<vmem>>) attributes {dimension_semantics = [#tpu.dimension_semantics<parallel>, #tpu.dimension_semantics<arbitrary>], iteration_bounds = array<i64: 2, 1>, scalar_prefetch = 0 : i64, scratch_operands = 2 : i64, tpu.core_type = #tpu.core_type<tc>, window_params = [{transform_indices = @transform_0, window_bounds = array<i64: 1, 8, 128>}, {transform_indices = @transform_1, window_bounds = array<i64: 1, 8, 128>}, {transform_indices = @transform_2, window_bounds = array<i64: 1, 1, 128>}]} {
    %c0_i32 = arith.constant 0 : i32
    %0 = arith.cmpi eq, %arg1, %c0_i32 : i32
    %1 = arith.extui %0 : i1 to i32
    %c0_i32_0 = arith.constant 0 : i32
    %2 = arith.cmpi ne, %1, %c0_i32_0 : i32
    scf.if %2 {
      %cst = arith.constant 0.000000e+00 : f32
      %20 = vector.broadcast %cst : f32 to vector<8x128xf32>
      %c0_16 = arith.constant 0 : index
      %c0_17 = arith.constant 0 : index
      %21 = vector.load %arg5[%c0_16, %c0_17] : memref<8x128xf32, #tpu.memory_space<vmem>>, vector<8x128xf32>
      tpu.vector_store %arg5[%c0_16, %c0_17], %20 {strides = array<i32>} : memref<8x128xf32, #tpu.memory_space<vmem>>, vector<8x128xf32>,
      %cst_18 = arith.constant 0.000000e+00 : f32
      %22 = vector.broadcast %cst_18 : f32 to vector<8x128xf32>
      %c0_19 = arith.constant 0 : index
      %c0_20 = arith.constant 0 : index
      %23 = vector.load %arg6[%c0_19, %c0_20] : memref<8x128xf32, #tpu.memory_space<vmem>>, vector<8x128xf32>
      tpu.vector_store %arg6[%c0_19, %c0_20], %22 {strides = array<i32>} : memref<8x128xf32, #tpu.memory_space<vmem>>, vector<8x128xf32>,
    } else {
    }
    %c0 = arith.constant 0 : index
    %c0_1 = arith.constant 0 : index
    %c0_2 = arith.constant 0 : index
    %3 = vector.load %arg2[%c0, %c0_1, %c0_2] : memref<1x8x128xf32, #tpu.memory_space<vmem>>, vector<1x8x128xf32>
    %4 = vector.shape_cast %3 : vector<1x8x128xf32> to vector<8x128xf32>
    %c0_3 = arith.constant 0 : index
    %c0_4 = arith.constant 0 : index
    %c0_5 = arith.constant 0 : index
    %5 = vector.load %arg3[%c0_3, %c0_4, %c0_5] : memref<1x8x128xf32, #tpu.memory_space<vmem>>, vector<1x8x128xf32>
    %6 = vector.shape_cast %5 : vector<1x8x128xf32> to vector<8x128xf32>
    %c0_6 = arith.constant 0 : index
    %c0_7 = arith.constant 0 : index
    %7 = vector.load %arg5[%c0_6, %c0_7] : memref<8x128xf32, #tpu.memory_space<vmem>>, vector<8x128xf32>
    %8 = arith.mulf %4, %6 : vector<8x128xf32>
    %9 = arith.addf %7, %8 : vector<8x128xf32>
    %c0_8 = arith.constant 0 : index
    %c0_9 = arith.constant 0 : index
    %10 = vector.load %arg5[%c0_8, %c0_9] : memref<8x128xf32, #tpu.memory_space<vmem>>, vector<8x128xf32>
    tpu.vector_store %arg5[%c0_8, %c0_9], %9 {strides = array<i32>} : memref<8x128xf32, #tpu.memory_space<vmem>>, vector<8x128xf32>,
    %c0_10 = arith.constant 0 : index
    %c0_11 = arith.constant 0 : index
    %11 = vector.load %arg6[%c0_10, %c0_11] : memref<8x128xf32, #tpu.memory_space<vmem>>, vector<8x128xf32>
    %12 = arith.mulf %4, %4 : vector<8x128xf32>
    %13 = arith.mulf %6, %6 : vector<8x128xf32>
    %14 = arith.addf %12, %13 : vector<8x128xf32>
    %15 = arith.addf %11, %14 : vector<8x128xf32>
    %c0_12 = arith.constant 0 : index
    %c0_13 = arith.constant 0 : index
    %16 = vector.load %arg6[%c0_12, %c0_13] : memref<8x128xf32, #tpu.memory_space<vmem>>, vector<8x128xf32>
    tpu.vector_store %arg6[%c0_12, %c0_13], %15 {strides = array<i32>} : memref<8x128xf32, #tpu.memory_space<vmem>>, vector<8x128xf32>,
    %c0_i32_14 = arith.constant 0 : i32
    %17 = arith.cmpi eq, %arg1, %c0_i32_14 : i32
    %18 = arith.extui %17 : i1 to i32
    %c0_i32_15 = arith.constant 0 : i32
    %19 = arith.cmpi ne, %18, %c0_i32_15 : i32
    scf.if %19 {
      %c0_16 = arith.constant 0 : index
      %c0_17 = arith.constant 0 : index
      %20 = vector.load %arg5[%c0_16, %c0_17] : memref<8x128xf32, #tpu.memory_space<vmem>>, vector<8x128xf32>
      %21 = vector.shape_cast %20 : vector<8x128xf32> to vector<1x8x128xf32>
      %cst = arith.constant dense<0.000000e+00> : vector<1xf32>
      %22 = vector.multi_reduction <add>, %21, %cst [1, 2] : vector<1x8x128xf32> to vector<1xf32>
      %23 = vector.shape_cast %22 : vector<1xf32> to vector<1x1x1xf32>
      %24 = vector.extract %23[0, 0, 0] : f32 from vector<1x1x1xf32>
      %c0_18 = arith.constant 0 : index
      %c0_19 = arith.constant 0 : index
      %25 = vector.load %arg6[%c0_18, %c0_19] : memref<8x128xf32, #tpu.memory_space<vmem>>, vector<8x128xf32>
      %26 = vector.shape_cast %25 : vector<8x128xf32> to vector<1x8x128xf32>
      %cst_20 = arith.constant dense<0.000000e+00> : vector<1xf32>
      %27 = vector.multi_reduction <add>, %26, %cst_20 [1, 2] : vector<1x8x128xf32> to vector<1xf32>
      %28 = vector.shape_cast %27 : vector<1xf32> to vector<1x1x1xf32>
      %29 = vector.extract %28[0, 0, 0] : f32 from vector<1x1x1xf32>
      %cst_21 = arith.constant 2.000000e+00 : f32
      %30 = arith.mulf %cst_21, %24 : f32
      %cst_22 = arith.constant 1.000000e+00 : f32
      %31 = arith.addf %30, %cst_22 : f32
      %cst_23 = arith.constant 1.000000e+00 : f32
      %32 = arith.addf %29, %cst_23 : f32
      %33 = arith.divf %31, %32 : f32
      %cst_24 = arith.constant 1.000000e+00 : f32
      %34 = arith.subf %cst_24, %33 : f32
      %35 = vector.broadcast %34 : f32 to vector<1x128xf32>
      %c0_25 = arith.constant 0 : index
      %c0_26 = arith.constant 0 : index
      %c0_27 = arith.constant 0 : index
      %36 = vector.load %arg4[%c0_25, %c0_26, %c0_27] : memref<1x1x128xf32, #tpu.memory_space<vmem>>, vector<1x1x128xf32>
      %37 = vector.shape_cast %36 : vector<1x1x128xf32> to vector<1x128xf32>
      %38 = vector.shape_cast %35 : vector<1x128xf32> to vector<1x1x128xf32>
      tpu.vector_store %arg4[%c0_25, %c0_26, %c0_27], %38 {strides = array<i32>} : memref<1x1x128xf32, #tpu.memory_space<vmem>>, vector<1x1x128xf32>,
    } else {
    }
    return
  }
  func.func @transform_0(%arg0: i32, %arg1: i32) -> (i32, i32, i32) {
    %c0_i32 = arith.constant 0 : i32
    %c0_i32_0 = arith.constant 0 : i32
    return %arg0, %c0_i32, %arg1 : i32, i32, i32
  }
  func.func @transform_1(%arg0: i32, %arg1: i32) -> (i32, i32, i32) {
    %c0_i32 = arith.constant 0 : i32
    %c0_i32_0 = arith.constant 0 : i32
    return %arg0, %c0_i32, %arg1 : i32, i32, i32
  }
  func.func @transform_2(%arg0: i32, %arg1: i32) -> (i32, i32, i32) {
    %c0_i32 = arith.constant 0 : i32
    %c0_i32_0 = arith.constant 0 : i32
    %c0_i32_1 = arith.constant 0 : i32
    return %arg0, %c0_i32, %c0_i32_0 : i32, i32, i32
  }
}

</mosaic_0001>

<llo_original>
// kernel: tpu_custom_call.1
$region0: #{tpu_custom_call.1}
  #allocation0 [shape = 'u32[]', space=smem, size = 0x4, offset = 0x4, fixed_abs, tag = 'smem constant byte address 0x4 - core index']
  #allocation1 [shape = 'u32[144,128]{1,0:T(1,128)}', space=vmem, size = 0x12000, scoped, tag = 'internal scratch']
  #allocation2 [shape = 'f32[8,128]{1,0:T(8,128)}', space=vmem, size = 0x1000, scoped, tag = 'scratch operand']
  #allocation3 [shape = 'f32[8,128]{1,0:T(8,128)}', space=vmem, size = 0x1000, scoped, tag = 'scratch operand']
  %s0 = inlined_call_operand.hbm [shape: f32[2,8,128], index: 0, kind: input, shape index: {}]
  %s1 = inlined_call_operand.hbm [shape: f32[2,8,128], index: 1, kind: input, shape index: {}]
  %s2 = inlined_call_operand.hbm [shape: f32[2,1,128], index: 2, kind: output, shape index: {}]
  %s3 = sld [smem:[#allocation0]]
  $region57: #{tpu_custom_call.1} parent=0
    _
  %s5 = ssub.s32 1, %s3
  %s6 = scalar_select 0, %s5, %s3
  $region1: #{tpu_custom_call.1} parent=0
    #allocation4 [shape = 'u8[8192]{0}', space=vmem, size = 0x2000, scoped, tag = 'input window, operand 0']
    #allocation5 [shape = 's32[2]{0}', space=sflag, size = 0x8, scoped, tag = 'scoped memory for tpu_custom_call.1']
    #allocation6 [shape = 's32[2]{0}', space=sflag, size = 0x8, scoped, tag = 'scoped memory for tpu_custom_call.1']
    #allocation7 [shape = 'u8[8192]{0}', space=vmem, size = 0x2000, scoped, tag = 'input window, operand 1']
    #allocation8 [shape = 's32[2]{0}', space=sflag, size = 0x8, scoped, tag = 'scoped memory for tpu_custom_call.1']
    #allocation9 [shape = 'u8[1024]{0}', space=vmem, size = 0x400, scoped, tag = 'output window, operand 0']
    %7 = vsyncpa [#allocation5], 0
    %s8 = scalar_lea.sflag [#allocation5], 1
    %9 = vsyncpa %s8, 0
    %10 = vsyncpa [#allocation8], 0
    %s11 = scalar_lea.sflag [#allocation8], 1
    %12 = vsyncpa %s11, 0
    %13 = vsyncpa [#allocation6], 0
    %s14 = scalar_lea.sflag [#allocation6], 1
    %15 = vsyncpa %s14, 0
    loop: start=0, step=1, limit=4
    $region2: #{tpu_custom_call.1} parent=1 // loop_pre_header
      _
    $region3: #{tpu_custom_call.1} parent=1 // loop_header
      %s17 = sphi 0, %s21
      %p18 = scmp.ge.s32.totalorder %s17, 4
      %s24 = sphi 0, %s36
      %s25 = sphi 0, %s32
      %s26 = sphi 0, %s24
      %s27 = sphi 0, %s25
      %s28 = sphi 0, %s26
      %s29 = sphi 0, %s27
      %s41 = sphi 0, %s43
      %s44 = sphi 0, %s41
      %s45 = sphi 0, %s44
      %s61 = sphi 0, %s45
      %s69 = sphi 0, %s71
      %s72 = sphi 0, %s69
      %s73 = sphi 0, %s72
      %s89 = sphi 0, %s73
      %s95 = sphi 0, %s97
      %s98 = sphi 0, %s95
      %s99 = sphi 0, %s98
      %s115 = sphi 0, %s99
    $region4: #{tpu_custom_call.1} parent=1 // loop_header_branch
      %20 = sbr.rel (%p18) target = $region8
    $region5: #{tpu_custom_call.1} parent=1 // loop_body
      %s22 = ssub.s32 %s17, 1
      %s23 = ssub.s32 %s17, 2
      %s30 = sadd.s32 1, %s25
      %p31 = scmp.ge.s32.totalorder %s30, 1
      %s32 = scalar_select %p31, 0, %s30
      %s33 = sadd.s32 1, %s24
      %s34 = scalar_select %p31, %s33, %s24
      %p35 = scmp.ge.s32.totalorder %s34, 2
      %s36 = scalar_select %p35, 0, %s34
      %s37 = ssub.s32 %s24, %s36
      %s38 = ssub.s32 %s25, %s32
      %s39 = sor.u32 %s37, %s38
      %p40 = scmp.eq.s32.totalorder %s39, 0
      %s42 = sadd.s32 %s41, 1
      %s43 = scalar_select %p40, %s41, %s42
      %p46 = pneg %p40
      %p47 = scmp.eq.s32.totalorder %s17, 1
      %p48 = por %p46, %p47
      %p49 = scmp.ne.s32.totalorder %s41, %s44
      %p50 = scmp.eq.s32.totalorder %s17, 0
      %p51 = por %p49, %p50
      %p52 = scmp.ne.s32.totalorder %s41, %s44
      %p53 = scmp.eq.s32.totalorder %s22, 1
      %p54 = por %p52, %p53
      %p55 = scmp.ne.s32.totalorder %s44, %s45
      %p56 = scmp.eq.s32.totalorder %s22, 0
      %p57 = por %p55, %p56
      %p58 = scmp.ne.s32.totalorder %s44, %s45
      %p59 = scmp.eq.s32.totalorder %s23, 1
      %p60 = por %p58, %p59
      %p62 = scmp.ne.s32.totalorder %s45, %s61
      %p63 = scmp.eq.s32.totalorder %s23, 0
      %p64 = por %p62, %p63
      %s65 = ssub.s32 %s24, %s36
      %s66 = ssub.s32 %s25, %s32
      %s67 = sor.u32 %s65, %s66
      %p68 = scmp.eq.s32.totalorder %s67, 0
      %s70 = sadd.s32 %s69, 1
      %s71 = scalar_select %p68, %s69, %s70
      %p74 = pneg %p68
      %p75 = scmp.eq.s32.totalorder %s17, 1
      %p76 = por %p74, %p75
      %p77 = scmp.ne.s32.totalorder %s69, %s72
      %p78 = scmp.eq.s32.totalorder %s17, 0
      %p79 = por %p77, %p78
      %p80 = scmp.ne.s32.totalorder %s69, %s72
      %p81 = scmp.eq.s32.totalorder %s22, 1
      %p82 = por %p80, %p81
      %p83 = scmp.ne.s32.totalorder %s72, %s73
      %p84 = scmp.eq.s32.totalorder %s22, 0
      %p85 = por %p83, %p84
      %p86 = scmp.ne.s32.totalorder %s72, %s73
      %p87 = scmp.eq.s32.totalorder %s23, 1
      %p88 = por %p86, %p87
      %p90 = scmp.ne.s32.totalorder %s73, %s89
      %p91 = scmp.eq.s32.totalorder %s23, 0
      %p92 = por %p90, %p91
      %s93 = ssub.s32 %s24, %s36
      %p94 = scmp.eq.s32.totalorder %s93, 0
      %s96 = sadd.s32 %s95, 1
      %s97 = scalar_select %p94, %s95, %s96
      %p100 = pneg %p94
      %p101 = scmp.eq.s32.totalorder %s17, 1
      %p102 = por %p100, %p101
      %p103 = scmp.ne.s32.totalorder %s95, %s98
      %p104 = scmp.eq.s32.totalorder %s17, 0
      %p105 = por %p103, %p104
      %p106 = scmp.ne.s32.totalorder %s95, %s98
      %p107 = scmp.eq.s32.totalorder %s22, 1
      %p108 = por %p106, %p107
      %p109 = scmp.ne.s32.totalorder %s98, %s99
      %p110 = scmp.eq.s32.totalorder %s22, 0
      %p111 = por %p109, %p110
      %p112 = scmp.ne.s32.totalorder %s98, %s99
      %p113 = scmp.eq.s32.totalorder %s23, 1
      %p114 = por %p112, %p113
      %p116 = scmp.ne.s32.totalorder %s99, %s115
      %p117 = scmp.eq.s32.totalorder %s23, 0
      %p118 = por %p116, %p117
      %p119 = scmp.le.s32.totalorder 1, %s17
      %p120 = scmp.lt.s32.totalorder %s17, 3
      %p121 = pnand %p119, %p120
      %p122 = pneg %p121
      // Predicated region
      $region9: #{tpu_custom_call.1} parent=5 // pred_check
        _
      $region10: #{tpu_custom_call.1} parent=5 // pred_check_branch
        %124 = sbr.rel (%p121) target = $region12
      $region11: #{tpu_custom_call.1} parent=5 // pred_region
        %s125 = ssub.s32 %s17, 1
      $region12: #{tpu_custom_call.1} parent=5 // pred_fallthru
        _
      %p126 = scmp.lt.s32.totalorder %s17, 2
      // Predicated region
      $region13: #{tpu_custom_call.1} parent=5 // pred_check
        %p127 = pneg %p126
      $region14: #{tpu_custom_call.1} parent=5 // pred_check_branch
        %129 = sbr.rel (%p127) target = $region16
      $region15: #{tpu_custom_call.1} parent=5 // pred_region
        // Predicated region
        $region17: #{tpu_custom_call.1} parent=15 // pred_check
          %p130 = pneg %p51
        $region18: #{tpu_custom_call.1} parent=15 // pred_check_branch
          %132 = sbr.rel (%p130) target = $region20
        $region19: #{tpu_custom_call.1} parent=15 // pred_region
          %s133 = sand.u32 %s41, 1
          %s134 = scalar_lea.sflag [#allocation5], %s133
          %s135 = sand.u32 %s41, 1
          %s136 = smul.addr %s135, 8
          %s137 = scalar_lea.vmem [#allocation4], %s136
          %s139 = ssub.s32 128, 128
          %140 = vsyncadd %s134, %s139
          %s141 = sadd.s32 %s25, %s24
          %s142 = smul.addr %s141, 128
          %s143 = scalar_lea.hbm %s0, %s142
          %s145 = sshll.u32 %s137, 4
          %s146 = int_to_ptr.vmem [resolvable:$true] %s145
          %148 = dma.hbm_to_vmem [thread:$0]  %s143, 128, %s146, %s134
        $region20: #{tpu_custom_call.1} parent=15 // pred_fallthru
          _
        // Predicated region
        $region21: #{tpu_custom_call.1} parent=15 // pred_check
          %p149 = pneg %p79
        $region22: #{tpu_custom_call.1} parent=15 // pred_check_branch
          %151 = sbr.rel (%p149) target = $region24
        $region23: #{tpu_custom_call.1} parent=15 // pred_region
          %s152 = sand.u32 %s69, 1
          %s153 = scalar_lea.sflag [#allocation8], %s152
          %s154 = sand.u32 %s69, 1
          %s155 = smul.addr %s154, 8
          %s156 = scalar_lea.vmem [#allocation7], %s155
          %s158 = ssub.s32 128, 128
          %159 = vsyncadd %s153, %s158
          %s160 = sadd.s32 %s25, %s24
          %s161 = smul.addr %s160, 128
          %s162 = scalar_lea.hbm %s1, %s161
          %s164 = sshll.u32 %s156, 4
          %s165 = int_to_ptr.vmem [resolvable:$true] %s164
          %167 = dma.hbm_to_vmem [thread:$0]  %s162, 128, %s165, %s153
        $region24: #{tpu_custom_call.1} parent=15 // pred_fallthru
          _
      $region16: #{tpu_custom_call.1} parent=5 // pred_fallthru
        _
      %p168 = scmp.le.s32.totalorder 1, %s17
      %p169 = scmp.lt.s32.totalorder %s17, 3
      %p170 = pnand %p168, %p169
      %p171 = pneg %p170
      // Predicated region
      $region25: #{tpu_custom_call.1} parent=5 // pred_check
        _
      $region26: #{tpu_custom_call.1} parent=5 // pred_check_branch
        %173 = sbr.rel (%p170) target = $region28
      $region27: #{tpu_custom_call.1} parent=5 // pred_region
        %s174 = ssub.s32 %s17, 1
        %s175 = sand.u32 %s44, 1
        %s176 = scalar_lea.sflag [#allocation5], %s175
        %s177 = sand.u32 %s44, 1
        %s178 = smul.addr %s177, 8
        %s179 = scalar_lea.vmem [#allocation4], %s178
        // Predicated region
        $region29: #{tpu_custom_call.1} parent=27 // pred_check
          %p180 = pneg %p57
        $region30: #{tpu_custom_call.1} parent=27 // pred_check_branch
          %182 = sbr.rel (%p180) target = $region32
        $region31: #{tpu_custom_call.1} parent=27 // pred_region
          %183 = dma.done %s176, 128
        $region32: #{tpu_custom_call.1} parent=27 // pred_fallthru
          _
        %s184 = sand.u32 %s72, 1
        %s185 = scalar_lea.sflag [#allocation8], %s184
        %s186 = sand.u32 %s72, 1
        %s187 = smul.addr %s186, 8
        %s188 = scalar_lea.vmem [#allocation7], %s187
        // Predicated region
        $region33: #{tpu_custom_call.1} parent=27 // pred_check
          %p189 = pneg %p85
        $region34: #{tpu_custom_call.1} parent=27 // pred_check_branch
          %191 = sbr.rel (%p189) target = $region36
        $region35: #{tpu_custom_call.1} parent=27 // pred_region
          %192 = dma.done %s185, 128
        $region36: #{tpu_custom_call.1} parent=27 // pred_fallthru
          _
        %s193 = sand.u32 %s44, 1
        %s194 = scalar_lea.sflag [#allocation5], %s193
        %s195 = sand.u32 %s44, 1
        %s196 = smul.addr %s195, 8
        %s197 = scalar_lea.vmem [#allocation4], %s196
        %p198 = pneg %p57
        %p199 = pneg %p54
        %s200 = sand.u32 %s72, 1
        %s201 = scalar_lea.sflag [#allocation8], %s200
        %s202 = sand.u32 %s72, 1
        %s203 = smul.addr %s202, 8
        %s204 = scalar_lea.vmem [#allocation7], %s203
        %p205 = pneg %p85
        %p206 = pneg %p82
        %p207 = pneg %p111
        %p208 = pneg %p108
        %s209 = sand.u32 %s98, 1
        %s210 = scalar_lea.sflag [#allocation6], %s209
        %s211 = sand.u32 %s98, 1
        %s212 = scalar_lea.vmem [#allocation9], %s211
        %p213 = scmp.eq.s32.totalorder %s27, 0
        // Predicated region
        $region37: #{tpu_custom_call.1} parent=27 // pred_check
          %p214 = pneg %p213
        $region38: #{tpu_custom_call.1} parent=27 // pred_check_branch
          %216 = sbr.rel (%p214) target = $region40
        $region39: #{tpu_custom_call.1} parent=27 // pred_region
          %217 = vst [vmem:[#allocation2] sm:$0xff] 0.0
          %218 = vst [vmem:[#allocation3] sm:$0xff] 0.0
        $region40: #{tpu_custom_call.1} parent=27 // pred_fallthru
          _
        %v219 = vld [vmem:[%s179] sm:$0xff]
        %v220 = vld [vmem:[%s188] sm:$0xff]
        %v221 = vld [vmem:[#allocation2] sm:$0xff]
        %v222 = vmul.f32 %v219, %v220
        %v223 = vadd.f32 %v221, %v222
        %224 = vst [vmem:[#allocation2] sm:$0xff] %v223
        %v225 = vld [vmem:[#allocation3] sm:$0xff]
        %v226 = vmul.f32 %v219, %v219
        %v227 = vmul.f32 %v220, %v220
        %v228 = vadd.f32 %v226, %v227
        %v229 = vadd.f32 %v225, %v228
        %230 = vst [vmem:[#allocation3] sm:$0xff] %v229
        // Predicated region
        $region41: #{tpu_custom_call.1} parent=27 // pred_check
          %p231 = pneg %p213
        $region42: #{tpu_custom_call.1} parent=27 // pred_check_branch
          %233 = sbr.rel (%p231) target = $region44
        $region43: #{tpu_custom_call.1} parent=27 // pred_region
          %v234 = vld [vmem:[#allocation2] sm:$0xff]
          %235 = vadd.xlane.f32.xlu0 %v234
          %v236 = vpop.xlane.xlu0 %235
          %v237 = vrot.slane %v236, 4
          %v238 = vadd.f32 %v236, %v237
          %v239 = vrot.slane %v238, 2
          %v240 = vadd.f32 %v238, %v239
          %v241 = vrot.slane %v240, 1
          %v242 = vadd.f32 %v240, %v241
          %s243 = vtos %v242
          %v244 = vld [vmem:[#allocation3] sm:$0xff]
          %245 = vadd.xlane.f32.xlu0 %v244
          %v246 = vpop.xlane.xlu0 %245
          %v247 = vrot.slane %v246, 4
          %v248 = vadd.f32 %v246, %v247
          %v249 = vrot.slane %v248, 2
          %v250 = vadd.f32 %v248, %v249
          %v251 = vrot.slane %v250, 1
          %v252 = vadd.f32 %v250, %v251
          %s253 = vtos %v252
          %s254 = smul.f32 %s243, 2.0
          %s255 = sadd.f32 %s254, 1.0
          %s256 = sadd.f32 %s253, 1.0
          %v257 = vstv %s256
          %v258 = vrcp.pop %v257
          %s259 = vtos %v258
          %s260 = smul.f32 %s255, %s259
          %s261 = ssub.f32 1.0, %s260
          %v262 = vstv %s261
          %263 = vst [vmem:[%s212] sm:$0x1] %v262
        $region44: #{tpu_custom_call.1} parent=27 // pred_fallthru
          _
        %s264 = sand.u32 %s98, 1
        %s265 = scalar_lea.sflag [#allocation6], %s264
        %s266 = sand.u32 %s98, 1
        %s267 = scalar_lea.vmem [#allocation9], %s266
        // Predicated region
        $region45: #{tpu_custom_call.1} parent=27 // pred_check
          %p268 = pneg %p108
        $region46: #{tpu_custom_call.1} parent=27 // pred_check_branch
          %270 = sbr.rel (%p268) target = $region48
        $region47: #{tpu_custom_call.1} parent=27 // pred_region
          %s272 = ssub.s32 16, 16
          %273 = vsyncadd %s265, %s272
          %s274 = smul.addr %s26, 16
          %s275 = scalar_lea.hbm %s2, %s274
          %s277 = sshll.u32 %s267, 4
          %s278 = int_to_ptr.vmem [resolvable:$true] %s277
          %280 = dma.vmem_to_hbm [thread:$0]  %s278, 16, %s275, %s265
        $region48: #{tpu_custom_call.1} parent=27 // pred_fallthru
          _
      $region28: #{tpu_custom_call.1} parent=5 // pred_fallthru
        _
      %p281 = scmp.le.s32.totalorder 2, %s17
      // Predicated region
      $region49: #{tpu_custom_call.1} parent=5 // pred_check
        %p282 = pneg %p281
      $region50: #{tpu_custom_call.1} parent=5 // pred_check_branch
        %284 = sbr.rel (%p282) target = $region52
      $region51: #{tpu_custom_call.1} parent=5 // pred_region
        %s285 = ssub.s32 %s17, 2
        // Predicated region
        $region53: #{tpu_custom_call.1} parent=51 // pred_check
          %p286 = pneg %p114
        $region54: #{tpu_custom_call.1} parent=51 // pred_check_branch
          %288 = sbr.rel (%p286) target = $region56
        $region55: #{tpu_custom_call.1} parent=51 // pred_region
          %s289 = sand.u32 %s99, 1
          %s290 = scalar_lea.sflag [#allocation6], %s289
          %s291 = sand.u32 %s99, 1
          %s292 = scalar_lea.vmem [#allocation9], %s291
          %293 = dma.done %s290, 16
        $region56: #{tpu_custom_call.1} parent=51 // pred_fallthru
          _
      $region52: #{tpu_custom_call.1} parent=5 // pred_fallthru
        _
    $region6: #{tpu_custom_call.1} parent=1 // loop_footer
      %s21 = sadd.s32 1, %s17
    $region7: #{tpu_custom_call.1} parent=1 // loop_footer_branch
      %16 = sbr.rel target = $region3
    $region8: #{tpu_custom_call.1} parent=1 // loop_exit
      _
    %294 = vsyncpa [#allocation5], 1
    %s295 = scalar_lea.sflag [#allocation5], 1
    %296 = vsyncpa %s295, 1
    %297 = vsyncpa [#allocation8], 1
    %s298 = scalar_lea.sflag [#allocation8], 1
    %299 = vsyncpa %s298, 1
    %300 = vsyncpa [#allocation6], 1
    %s301 = scalar_lea.sflag [#allocation6], 1
    %302 = vsyncpa %s301, 1

</llo_original>
